<compile_context>
chip_gen: v7x
topology: tpu7x:2x2x1
jax: 0.10.0
libtpu: 0.0.40
codegen_flags: <defaults>
</compile_context>

<pallas_src>
import functools

import jax
import jax.numpy as jnp
import numpy as np
from jax.experimental import pallas as pl
from jax.experimental.pallas import tpu as pltpu


# ------------------------------------------------------------------ helpers --

_VMEM_LIMIT_BYTES = 48 * 1024 * 1024      # safe on v5e/v6e (128 MiB) & v7x (64 MiB)
_FALLBACK_ELEMS = 16384                   # below this, padding/call overhead dominates
_BN_FUSED_BYTES = 6 * 1024 * 1024         # x block budget for the fused BN path


def _round_up(x, m):
    return ((x + m - 1) // m) * m


def _pad2d(x, rows, cols):
    r, c = x.shape
    if r == rows and c == cols:
        return x
    return jnp.pad(x, ((0, rows - r), (0, cols - c)))


def _pick_tile(dim, align, max_tile):
    """Largest multiple of `align` <= max_tile that divides round_up(dim, align).

    Minimizes pure-zero padded blocks (e.g. K=600 -> Kp=640, tk=640, not 1024).
    """
    padded = _round_up(dim, align)
    t = max(align, (min(max_tile, padded) // align) * align)
    while padded % t:
        t -= align
    return t, padded


def _row_tile(batch, fp, max_rows=512, bytes_budget=2 * 1024 * 1024):
    """VMEM-aware batch-tile for elementwise kernels (block = tm x Fp f32)."""
    rows_fit = max(8, (bytes_budget // (fp * 4)) // 8 * 8)
    tm, bp = _pick_tile(batch, 8, min(max_rows, rows_fit))
    if bp // tm < 2 and bp >= 16:                 # expose >=2 blocks for v7x's 2 TCs
        tm, bp = _pick_tile(batch, 8, max(8, bp // 2))
    return tm, bp


def _params(semantics):
    return pltpu.CompilerParams(dimension_semantics=semantics,
                                vmem_limit_bytes=_VMEM_LIMIT_BYTES)


# ------------------------------------------------------------------ kernels --

def _matmul_bias_kernel(x_ref, w_ref, b_ref, o_ref, acc_ref):
    """y = x @ W + b with W stored [K, N]; f32 accumulator over the K grid axis."""
    @pl.when(pl.program_id(2) == 0)
    def _():
        acc_ref[...] = jnp.zeros_like(acc_ref)

    x = x_ref[...]
    w = w_ref[...]
    if w.dtype == jnp.bfloat16 and x.dtype != jnp.bfloat16:
        x = x.astype(jnp.bfloat16)                # bf16 MXU path (flag-gated)
    acc_ref[...] += jax.lax.dot_general(
        x, w, dimension_numbers=(((1,), (0,)), ((), ())),
        preferred_element_type=jnp.float32)

    @pl.when(pl.program_id(2) == pl.num_programs(2) - 1)
    def _():
        o_ref[...] = (acc_ref[...] + b_ref[...]).astype(o_ref.dtype)


def _matmul_bias_dual_kernel(x_ref, w_ref, b_ref, o_ref, oneg_ref, acc_ref):
    """Same as above, but also writes -(x@W+b): proxy=[I;-I] fused at finalize."""
    @pl.when(pl.program_id(2) == 0)
    def _():
        acc_ref[...] = jnp.zeros_like(acc_ref)

    x = x_ref[...]
    w = w_ref[...]
    if w.dtype == jnp.bfloat16 and x.dtype != jnp.bfloat16:
        x = x.astype(jnp.bfloat16)
    acc_ref[...] += jax.lax.dot_general(
        x, w, dimension_numbers=(((1,), (0,)), ((), ())),
        preferred_element_type=jnp.float32)

    @pl.when(pl.program_id(2) == pl.num_programs(2) - 1)
    def _():
        y = acc_ref[...] + b_ref[...]
        o_ref[...] = y.astype(o_ref.dtype)
        oneg_ref[...] = (-y).astype(oneg_ref.dtype)


def _l2norm_kernel(x_ref, o_ref):
    # torch normalize(p=2, dim=1): x / max(||x||, 1e-12) == x * rsqrt(max(ss, 1e-24))
    x = x_ref[...].astype(jnp.float32)
    ss = jnp.sum(x * x, axis=1, keepdims=True)
    inv = jax.lax.rsqrt(jnp.maximum(ss, 1e-24))
    o_ref[...] = (x * inv).astype(o_ref.dtype)


def _bn_fused_kernel(x_ref, g_ref, b_ref, o_ref, *, n, eps):
    """Single-pass BatchNorm1d (whole padded [B, F] block resident in VMEM)."""
    x = x_ref[...].astype(jnp.float32)
    inv_n = jnp.float32(1.0 / n)
    s = jnp.sum(x, axis=0, keepdims=True)
    ssq = jnp.sum(x * x, axis=0, keepdims=True)
    mean = s * inv_n
    var = ssq * inv_n - mean * mean               # biased variance, as torch
    scale = jax.lax.rsqrt(var + eps) * g_ref[...]
    shift = b_ref[...] - mean * scale
    o_ref[...] = (x * scale + shift).astype(o_ref.dtype)


def _bn_stats_kernel(x_ref, g_ref, b_ref, scale_ref, shift_ref, sum_sc, ssq_sc,
                     *, n, eps):
    """Pass 1: accumulate sums across batch tiles; finalize scale/shift once."""
    @pl.when(pl.program_id(0) == 0)
    def _():
        sum_sc[...] = jnp.zeros_like(sum_sc)
        ssq_sc[...] = jnp.zeros_like(ssq_sc)

    x = x_ref[...].astype(jnp.float32)
    sum_sc[...] += jnp.sum(x, axis=0, keepdims=True)
    ssq_sc[...] += jnp.sum(x * x, axis=0, keepdims=True)

    @pl.when(pl.program_id(0) == pl.num_programs(0) - 1)
    def _():
        inv_n = jnp.float32(1.0 / n)
        mean = sum_sc[...] * inv_n
        var = ssq_sc[...] * inv_n - mean * mean
        scale = jax.lax.rsqrt(var + eps) * g_ref[...]
        scale_ref[...] = scale
        shift_ref[...] = b_ref[...] - mean * scale


def _bn_apply_kernel(x_ref, scale_ref, shift_ref, o_ref):
    """Pass 2: pure FMA normalize (rsqrt already hoisted into pass 1)."""
    x = x_ref[...].astype(jnp.float32)
    o_ref[...] = (x * scale_ref[...] + shift_ref[...]).astype(o_ref.dtype)


# --------------------------------------------------------------- pallas glue --

def linear_pallas(x, w_kn, b, *, dual=False):
    """x:[B,K], w_kn:[K,N] (pre-transposed), b:[1,N] -> x@w+b (and its negation)."""
    B, K = x.shape
    N = w_kn.shape[1]

    if B * max(K, N) < _FALLBACK_ELEMS:
        # Tiny problem: lane-padding + pallas_call fixed cost would dominate.
        h = jnp.dot(x, w_kn.astype(jnp.float32)) + b
        return (h, -h) if dual else h

    tm, Bp = _pick_tile(B, 8, 512)
    tn, Np = _pick_tile(N, 128, 512)
    tk, Kp = _pick_tile(K, 128, 2048)
    # v7x has 2 TensorCores: make sure the parallel (M, N) axes expose >=2 blocks.
    if (Bp // tm) * (Np // tn) < 2:
        if Bp >= 16:
            tm, Bp = _pick_tile(B, 8, max(8, Bp // 2))
        elif Np >= 256:
            tn, Np = _pick_tile(N, 128, max(128, Np // 2))

    xp = _pad2d(x, Bp, Kp)                    # zero padding: no effect on the dot
    wp = _pad2d(w_kn, Kp, Np)
    bp = _pad2d(b, 1, Np)

    grid = (Bp // tm, Np // tn, Kp // tk)
    in_specs = [
        pl.BlockSpec((tm, tk), lambda i, j, k: (i, k)),
        pl.BlockSpec((tk, tn), lambda i, j, k: (k, j)),
        # bias block index is constant across k -> stays resident; re-DMA only
        # when j changes (a few hundred bytes).
        pl.BlockSpec((1, tn), lambda i, j, k: (0, j)),
    ]
    out_spec = pl.BlockSpec((tm, tn), lambda i, j, k: (i, j))

    if dual:
        kernel = _matmul_bias_dual_kernel
        out_shape = (jax.ShapeDtypeStruct((Bp, Np), jnp.float32),
                     jax.ShapeDtypeStruct((Bp, Np), jnp.float32))
        out_specs = (out_spec, out_spec)
    else:
        kernel = _matmul_bias_kernel
        out_shape = jax.ShapeDtypeStruct((Bp, Np), jnp.float32)
        out_specs = out_spec

    result = pl.pallas_call(
        kernel,
        out_shape=out_shape,
        grid_spec=pltpu.PrefetchScalarGridSpec(
            num_scalar_prefetch=0,
            grid=grid,
            in_specs=in_specs,
            out_specs=out_specs,
            scratch_shapes=[pltpu.VMEM((tm, tn), jnp.float32)],
        ),
        compiler_params=_params(("parallel", "parallel", "arbitrary")),
    )(xp, wp, bp)

    if dual:
        pos, neg = result
        return pos[:B, :N], neg[:B, :N]
    return result[:B, :N]


def orthogonal_pallas(x, we_kn, be):
    """hidden = x @ We + be ; out = hidden @ proxy.T with proxy = [I; -I].

    proxy = [I; -I] => out = concat([h, -h], axis=1).  The -h is produced by
    the matmul kernel's finalize (free under the output DMA); the concat that
    remains is pure layout plumbing.
    """
    pos, neg = linear_pallas(x, we_kn, be, dual=True)
    return jnp.concatenate([pos, neg], axis=1)


def l2norm_pallas(x):
    B, F = x.shape
    if B * F < _FALLBACK_ELEMS:
        ss = jnp.sum(x * x, axis=1, keepdims=True)
        return x * jax.lax.rsqrt(jnp.maximum(ss, 1e-24))

    Fp = _round_up(F, 128)
    tm, Bp = _row_tile(B, Fp)
    xp = _pad2d(x, Bp, Fp)                    # zero feature padding: ||x|| unchanged

    out = pl.pallas_call(
        _l2norm_kernel,
        out_shape=jax.ShapeDtypeStruct((Bp, Fp), jnp.float32),
        grid_spec=pltpu.PrefetchScalarGridSpec(
            num_scalar_prefetch=0,
            grid=(Bp // tm,),
            in_specs=[pl.BlockSpec((tm, Fp), lambda i: (i, 0))],
            out_specs=pl.BlockSpec((tm, Fp), lambda i: (i, 0)),
        ),
        compiler_params=_params(("parallel",)),
    )(xp)
    return out[:B, :F]


def batchnorm1d_pallas(x, gamma, beta, eps=1e-5, force_two_pass=False):
    """BatchNorm1d training-mode forward (fresh module => batch statistics)."""
    # TODO(synk): running_mean/running_var tracking is a training side effect
    # and is not modelled; output matches a freshly constructed torch module.
    B, F = x.shape
    if B * F < _FALLBACK_ELEMS and not force_two_pass:
        mu = jnp.mean(x, axis=0, keepdims=True)
        var = jnp.mean(x * x, axis=0, keepdims=True) - mu * mu
        return (x - mu) * (jax.lax.rsqrt(var + eps) * gamma) + beta

    Fp = _round_up(F, 128)
    gp = _pad2d(gamma, 1, Fp)
    bp = _pad2d(beta, 1, Fp)

    Bp_full = _round_up(B, 8)
    if (not force_two_pass) and (Bp_full * Fp * 4 <= _BN_FUSED_BYTES):
        # Fused single-pass: x read once from HBM, written once.
        xp = _pad2d(x, Bp_full, Fp)           # padded rows are zero -> sums unchanged
        out = pl.pallas_call(
            functools.partial(_bn_fused_kernel, n=float(B), eps=float(eps)),
            out_shape=jax.ShapeDtypeStruct((Bp_full, Fp), jnp.float32),
            grid_spec=pltpu.PrefetchScalarGridSpec(
                num_scalar_prefetch=0,
                grid=(1,),
                in_specs=[pl.BlockSpec((Bp_full, Fp), lambda i: (0, 0)),
                          pl.BlockSpec((1, Fp), lambda i: (0, 0)),
                          pl.BlockSpec((1, Fp), lambda i: (0, 0))],
                out_specs=pl.BlockSpec((Bp_full, Fp), lambda i: (0, 0)),
            ),
            compiler_params=_params(("arbitrary",)),
        )(xp, gp, bp)
        return out[:B, :F]

    # Two-pass: batch-tiled stats accumulation (finalizes scale/shift once),
    # then a batch-parallel FMA apply pass.
    tm, Bp = _row_tile(B, Fp)
    xp = _pad2d(x, Bp, Fp)
    grid = (Bp // tm,)

    scale, shift = pl.pallas_call(
        functools.partial(_bn_stats_kernel, n=float(B), eps=float(eps)),
        out_shape=(jax.ShapeDtypeStruct((1, Fp), jnp.float32),
                   jax.ShapeDtypeStruct((1, Fp), jnp.float32)),
        grid_spec=pltpu.PrefetchScalarGridSpec(
            num_scalar_prefetch=0,
            grid=grid,
            in_specs=[pl.BlockSpec((tm, Fp), lambda i: (i, 0)),
                      pl.BlockSpec((1, Fp), lambda i: (0, 0)),
                      pl.BlockSpec((1, Fp), lambda i: (0, 0))],
            out_specs=(pl.BlockSpec((1, Fp), lambda i: (0, 0)),
                       pl.BlockSpec((1, Fp), lambda i: (0, 0))),
            scratch_shapes=[pltpu.VMEM((1, Fp), jnp.float32),
                            pltpu.VMEM((1, Fp), jnp.float32)],
        ),
        compiler_params=_params(("arbitrary",)),
    )(xp, gp, bp)

    out = pl.pallas_call(
        _bn_apply_kernel,
        out_shape=jax.ShapeDtypeStruct((Bp, Fp), jnp.float32),
        grid_spec=pltpu.PrefetchScalarGridSpec(
            num_scalar_prefetch=0,
            grid=grid,
            in_specs=[pl.BlockSpec((tm, Fp), lambda i: (i, 0)),
                      pl.BlockSpec((1, Fp), lambda i: (0, 0)),
                      pl.BlockSpec((1, Fp), lambda i: (0, 0))],
            out_specs=pl.BlockSpec((tm, Fp), lambda i: (i, 0)),
        ),
        compiler_params=_params(("parallel",)),
    )(xp, scale, shift)
    return out[:B, :F]


# --------------------------------------------------------------- cell module --

class CellPallas:
    """Pallas port of `cell`. Params are built deterministically in-script."""

    def __init__(self, module_type='linear', param_list=None, key=None,
                 use_bf16_mxu=False):
        self.module_type = module_type
        key = key if key is not None else jax.random.PRNGKey(42)
        wdt = jnp.bfloat16 if use_bf16_mxu else jnp.float32

        if module_type == 'linear':
            in_f, out_f = param_list[1], param_list[3]
            k1, k2 = jax.random.split(key)
            bound = 1.0 / np.sqrt(in_f)
            # weights stored pre-transposed [K, N] (static) for a transpose-free MXU feed
            self.w_kn = jax.random.uniform(k1, (in_f, out_f), jnp.float32,
                                           -bound, bound).astype(wdt)
            self.b = jax.random.uniform(k2, (1, out_f), jnp.float32, -bound, bound)
        elif module_type == 'orthogonal':
            feat_dim, class_num = param_list[1], param_list[3]
            proxy_dim = int(np.ceil(class_num / 2))
            k1, k2 = jax.random.split(key)
            bound = 1.0 / np.sqrt(feat_dim)
            self.we_kn = jax.random.uniform(k1, (feat_dim, proxy_dim), jnp.float32,
                                            -bound, bound).astype(wdt)
            self.be = jax.random.uniform(k2, (1, proxy_dim), jnp.float32, -bound, bound)
            eye = np.identity(proxy_dim, dtype=np.float32)
            self.proxy = jnp.asarray(np.vstack((eye, -eye)))   # reference only
        elif module_type in ('etf', 'norm'):
            num_features = param_list[1]
            self.gamma = jnp.ones((1, num_features), jnp.float32)
            self.beta = jnp.zeros((1, num_features), jnp.float32)
        elif module_type in ('identity', 'l2'):
            pass
        else:
            raise ValueError(module_type)

    def __call__(self, feature):
        if self.module_type == 'linear':
            return linear_pallas(feature, self.w_kn, self.b)
        elif self.module_type == 'orthogonal':
            return orthogonal_pallas(feature, self.we_kn, self.be)
        elif self.module_type in ('etf', 'norm'):
            return batchnorm1d_pallas(feature, self.gamma, self.beta)
        elif self.module_type == 'l2':
            return l2norm_pallas(feature)
        elif self.module_type == 'identity':
            return feature  # no_meaning: pass-through


# --------------------------------------------------------------------- main --

if __name__ == "__main__":
    B, FEAT, CLASSES = 128, 256, 10
    feature = jax.random.normal(jax.random.PRNGKey(0), (B, FEAT), jnp.float32)
    feat_np = np.asarray(feature)

    # param_list layout implied by `cell`: [.., in/feat dim, .., out dim / class_num]
    param_list = [None, FEAT, None, CLASSES]

    # linear (f32 MXU path)
    lin = CellPallas('linear', param_list, jax.random.PRNGKey(7))
    y = jax.block_until_ready(lin(feature))
    ref = feat_np @ np.asarray(lin.w_kn, np.float32) + np.asarray(lin.b)
    assert np.allclose(np.asarray(y), ref, rtol=1e-2, atol=1e-2)

    # linear (bf16 MXU path, flag-gated; looser tolerance by construction)
    lin_b = CellPallas('linear', param_list, jax.random.PRNGKey(7), use_bf16_mxu=True)
    yb = jax.block_until_ready(lin_b(feature))
    ref_b = feat_np @ np.asarray(lin_b.w_kn, np.float32) + np.asarray(lin_b.b)
    assert np.allclose(np.asarray(yb), ref_b, rtol=5e-2, atol=5e-2)

    # orthogonal (reference uses the actual proxy matmul)
    orth = CellPallas('orthogonal', param_list, jax.random.PRNGKey(7))
    yo = jax.block_until_ready(orth(feature))
    hid = feat_np @ np.asarray(orth.we_kn, np.float32) + np.asarray(orth.be)
    ref_o = hid @ np.asarray(orth.proxy).T
    assert np.allclose(np.asarray(yo), ref_o, rtol=1e-2, atol=1e-2)

    # l2 normalize
    l2 = CellPallas('l2', param_list)
    yl = jax.block_until_ready(l2(feature))
    ref_l2 = feat_np / np.maximum(np.linalg.norm(feat_np, axis=1, keepdims=True), 1e-12)
    assert np.allclose(np.asarray(yl), ref_l2, rtol=1e-3, atol=1e-3)

    # batchnorm (fused single-pass path; training-mode batch statistics)
    bn = CellPallas('norm', param_list)
    ybn = jax.block_until_ready(bn(feature))
    mu = feat_np.mean(axis=0, keepdims=True)
    var = feat_np.var(axis=0, keepdims=True)
    ref_bn = (feat_np - mu) / np.sqrt(var + 1e-5)
    assert np.allclose(np.asarray(ybn), ref_bn, rtol=1e-3, atol=1e-3)

    # batchnorm (two-pass path, exercised explicitly)
    ybn2 = jax.block_until_ready(
        batchnorm1d_pallas(feature, bn.gamma, bn.beta, force_two_pass=True))
    assert np.allclose(np.asarray(ybn2), ref_bn, rtol=1e-3, atol=1e-3)

    # identity
    ident = CellPallas('identity', param_list)
    assert np.array_equal(np.asarray(ident(feature)), feat_np)

    # tiny-shape fallback path (lane padding would dominate -> plain XLA)
    tiny = jax.random.normal(jax.random.PRNGKey(1), (8, 32), jnp.float32)
    tiny_param = [None, 32, None, CLASSES]
    for mtype in ('linear', 'orthogonal', 'l2', 'norm', 'identity'):
        _ = jax.block_until_ready(
            CellPallas(mtype, tiny_param, jax.random.PRNGKey(3))(tiny))

    print("KERNEL_OK")
</pallas_src>

<mosaic_0001>
module attributes {stable_mosaic.version = 11 : i64} {
  func.func @_matmul_bias_kernel(%arg0: i32, %arg1: i32, %arg2: i32, %arg3: memref<64x256xf32, #tpu.memory_space<vmem>>, %arg4: memref<256x128xf32, #tpu.memory_space<vmem>>, %arg5: memref<1x128xf32, #tpu.memory_space<vmem>>, %arg6: memref<64x128xf32, #tpu.memory_space<vmem>>, %arg7: memref<64x128xf32, #tpu.memory_space<vmem>>) attributes {dimension_semantics = [#tpu.dimension_semantics<parallel>, #tpu.dimension_semantics<parallel>, #tpu.dimension_semantics<arbitrary>], iteration_bounds = array<i64: 2, 1, 1>, scalar_prefetch = 0 : i64, scratch_operands = 1 : i64, tpu.core_type = #tpu.core_type<tc>, window_params = [{transform_indices = @transform_0, window_bounds = array<i64: 64, 256>}, {transform_indices = @transform_1, window_bounds = array<i64: 256, 128>}, {transform_indices = @transform_2, window_bounds = array<i64: 1, 128>}, {transform_indices = @transform_3, window_bounds = array<i64: 64, 128>}]} {
    %c0_i32 = arith.constant 0 : i32
    %0 = arith.cmpi eq, %arg2, %c0_i32 : i32
    %1 = arith.extui %0 : i1 to i32
    %c0_i32_0 = arith.constant 0 : i32
    %2 = arith.cmpi ne, %1, %c0_i32_0 : i32
    scf.if %2 {
      %cst_10 = arith.constant 0.000000e+00 : f32
      %12 = vector.broadcast %cst_10 : f32 to vector<64x128xf32>
      %c0_11 = arith.constant 0 : index
      %c0_12 = arith.constant 0 : index
      %13 = vector.load %arg7[%c0_11, %c0_12] : memref<64x128xf32, #tpu.memory_space<vmem>>, vector<64x128xf32>
      tpu.vector_store %arg7[%c0_11, %c0_12], %12 {strides = array<i32>} : memref<64x128xf32, #tpu.memory_space<vmem>>, vector<64x128xf32>,
    } else {
    }
    %c0 = arith.constant 0 : index
    %c0_1 = arith.constant 0 : index
    %3 = vector.load %arg3[%c0, %c0_1] : memref<64x256xf32, #tpu.memory_space<vmem>>, vector<64x256xf32>
    %c0_2 = arith.constant 0 : index
    %c0_3 = arith.constant 0 : index
    %4 = vector.load %arg4[%c0_2, %c0_3] : memref<256x128xf32, #tpu.memory_space<vmem>>, vector<256x128xf32>
    %c0_4 = arith.constant 0 : index
    %c0_5 = arith.constant 0 : index
    %5 = vector.load %arg7[%c0_4, %c0_5] : memref<64x128xf32, #tpu.memory_space<vmem>>, vector<64x128xf32>
    %cst = arith.constant dense<0.000000e+00> : vector<64x128xf32>
    %6 = tpu.matmul %3, %4, %cst {dimension_numbers = #tpu.dot_dimension_numbers<[1], [0], [0], [1], [0, 0, 1, 1], [], []>} : vector<64x256xf32>, vector<256x128xf32>, vector<64x128xf32> -> vector<64x128xf32>
    %7 = arith.addf %5, %6 : vector<64x128xf32>
    %c0_6 = arith.constant 0 : index
    %c0_7 = arith.constant 0 : index
    %8 = vector.load %arg7[%c0_6, %c0_7] : memref<64x128xf32, #tpu.memory_space<vmem>>, vector<64x128xf32>
    tpu.vector_store %arg7[%c0_6, %c0_7], %7 {strides = array<i32>} : memref<64x128xf32, #tpu.memory_space<vmem>>, vector<64x128xf32>,
    %c0_i32_8 = arith.constant 0 : i32
    %9 = arith.cmpi eq, %arg2, %c0_i32_8 : i32
    %10 = arith.extui %9 : i1 to i32
    %c0_i32_9 = arith.constant 0 : i32
    %11 = arith.cmpi ne, %10, %c0_i32_9 : i32
    scf.if %11 {
      %c0_10 = arith.constant 0 : index
      %c0_11 = arith.constant 0 : index
      %12 = vector.load %arg7[%c0_10, %c0_11] : memref<64x128xf32, #tpu.memory_space<vmem>>, vector<64x128xf32>
      %c0_12 = arith.constant 0 : index
      %c0_13 = arith.constant 0 : index
      %13 = vector.load %arg5[%c0_12, %c0_13] : memref<1x128xf32, #tpu.memory_space<vmem>>, vector<1x128xf32>
      %14 = vector.broadcast %13 : vector<1x128xf32> to vector<64x128xf32>
      %15 = arith.addf %12, %14 : vector<64x128xf32>
      %c0_14 = arith.constant 0 : index
      %c0_15 = arith.constant 0 : index
      %16 = vector.load %arg6[%c0_14, %c0_15] : memref<64x128xf32, #tpu.memory_space<vmem>>, vector<64x128xf32>
      tpu.vector_store %arg6[%c0_14, %c0_15], %15 {strides = array<i32>} : memref<64x128xf32, #tpu.memory_space<vmem>>, vector<64x128xf32>,
    } else {
    }
    return
  }
  func.func @transform_0(%arg0: i32, %arg1: i32, %arg2: i32) -> (i32, i32) {
    %c0_i32 = arith.constant 0 : i32
    return %arg0, %arg2 : i32, i32
  }
  func.func @transform_1(%arg0: i32, %arg1: i32, %arg2: i32) -> (i32, i32) {
    %c0_i32 = arith.constant 0 : i32
    return %arg2, %arg1 : i32, i32
  }
  func.func @transform_2(%arg0: i32, %arg1: i32, %arg2: i32) -> (i32, i32) {
    %c0_i32 = arith.constant 0 : i32
    %c0_i32_0 = arith.constant 0 : i32
    return %c0_i32, %arg1 : i32, i32
  }
  func.func @transform_3(%arg0: i32, %arg1: i32, %arg2: i32) -> (i32, i32) {
    %c0_i32 = arith.constant 0 : i32
    return %arg0, %arg1 : i32, i32
  }
}

</mosaic_0001>

<llo_original>
// kernel: tpu_custom_call.1
$region0: #{tpu_custom_call.1}
  #allocation0 [shape = 'u32[]', space=smem, size = 0x4, offset = 0x4, fixed_abs, tag = 'smem constant byte address 0x4 - core index']
  #allocation1 [shape = 'u32[144,128]{1,0:T(1,128)}', space=vmem, size = 0x12000, scoped, tag = 'internal scratch']
  #allocation2 [shape = 'f32[64,128]{1,0:T(8,128)}', space=vmem, size = 0x8000, scoped, tag = 'scratch operand']
  %s0 = inlined_call_operand.hbm [shape: f32[128,256], index: 0, kind: input, shape index: {}]
  %s1 = inlined_call_operand.hbm [shape: f32[256,128], index: 1, kind: input, shape index: {}]
  %s2 = inlined_call_operand.vmem [shape: f32[1,128], index: 2, kind: input, shape index: {}]
  %s3 = inlined_call_operand.hbm [shape: f32[128,128], index: 3, kind: output, shape index: {}]
  %s4 = sld [smem:[#allocation0]]
  $region61: #{tpu_custom_call.1} parent=0
    _
  %s6 = ssub.s32 1, %s4
  %s7 = scalar_select 0, %s6, %s4
  $region1: #{tpu_custom_call.1} parent=0
    #allocation3 [shape = 'u8[131072]{0}', space=vmem, size = 0x20000, scoped, tag = 'input window, operand 0']
    #allocation4 [shape = 's32[2]{0}', space=sflag, size = 0x8, scoped, tag = 'scoped memory for tpu_custom_call.1']
    #allocation5 [shape = 's32[2]{0}', space=sflag, size = 0x8, scoped, tag = 'scoped memory for tpu_custom_call.1']
    #allocation6 [shape = 'u8[131072]{0}', space=vmem, size = 0x20000, scoped, tag = 'input window, operand 1, single buffered']
    #allocation7 [shape = 's32[1]{0}', space=sflag, size = 0x4, scoped, tag = 'scoped memory for tpu_custom_call.1']
    #allocation8 [shape = 'u8[65536]{0}', space=vmem, size = 0x10000, scoped, tag = 'output window, operand 0']
    %8 = vsyncpa [#allocation4], 0
    %s9 = scalar_lea.sflag [#allocation4], 1
    %10 = vsyncpa %s9, 0
    %11 = vsyncpa [#allocation7], 0
    %12 = vsyncpa [#allocation5], 0
    %s13 = scalar_lea.sflag [#allocation5], 1
    %14 = vsyncpa %s13, 0
    loop: start=0, step=1, limit=4
    $region2: #{tpu_custom_call.1} parent=1 // loop_pre_header
      _
    $region3: #{tpu_custom_call.1} parent=1 // loop_header
      %s16 = sphi 0, %s20
      %p17 = scmp.ge.s32.totalorder %s16, 4
      %s23 = sphi 0, %s42
      %s24 = sphi 0, %s38
      %s25 = sphi 0, %s34
      %s26 = sphi 0, %s23
      %s27 = sphi 0, %s24
      %s28 = sphi 0, %s25
      %s29 = sphi 0, %s26
      %s30 = sphi 0, %s27
      %s31 = sphi 0, %s28
      %s47 = sphi 0, %s49
      %s50 = sphi 0, %s47
      %s51 = sphi 0, %s50
      %s67 = sphi 0, %s51
      %s75 = sphi 0, %s77
      %s78 = sphi 0, %s75
      %s79 = sphi 0, %s78
      %s95 = sphi 0, %s79
      %s101 = sphi 0, %s103
      %s104 = sphi 0, %s101
      %s105 = sphi 0, %s104
      %s121 = sphi 0, %s105
      %s129 = sphi 0, %s131
      %s132 = sphi 0, %s129
      %s133 = sphi 0, %s132
      %s149 = sphi 0, %s133
    $region4: #{tpu_custom_call.1} parent=1 // loop_header_branch
      %19 = sbr.rel (%p17) target = $region8
    $region5: #{tpu_custom_call.1} parent=1 // loop_body
      %s21 = ssub.s32 %s16, 1
      %s22 = ssub.s32 %s16, 2
      %s32 = sadd.s32 1, %s25
      %p33 = scmp.ge.s32.totalorder %s32, 1
      %s34 = scalar_select %p33, 0, %s32
      %s35 = sadd.s32 1, %s24
      %s36 = scalar_select %p33, %s35, %s24
      %p37 = scmp.ge.s32.totalorder %s36, 1
      %s38 = scalar_select %p37, 0, %s36
      %s39 = sadd.s32 1, %s23
      %s40 = scalar_select %p37, %s39, %s23
      %p41 = scmp.ge.s32.totalorder %s40, 2
      %s42 = scalar_select %p41, 0, %s40
      %s43 = ssub.s32 %s23, %s42
      %s44 = ssub.s32 %s25, %s34
      %s45 = sor.u32 %s43, %s44
      %p46 = scmp.eq.s32.totalorder %s45, 0
      %s48 = sadd.s32 %s47, 1
      %s49 = scalar_select %p46, %s47, %s48
      %p52 = pneg %p46
      %p53 = scmp.eq.s32.totalorder %s16, 1
      %p54 = por %p52, %p53
      %p55 = scmp.ne.s32.totalorder %s47, %s50
      %p56 = scmp.eq.s32.totalorder %s16, 0
      %p57 = por %p55, %p56
      %p58 = scmp.ne.s32.totalorder %s47, %s50
      %p59 = scmp.eq.s32.totalorder %s21, 1
      %p60 = por %p58, %p59
      %p61 = scmp.ne.s32.totalorder %s50, %s51
      %p62 = scmp.eq.s32.totalorder %s21, 0
      %p63 = por %p61, %p62
      %p64 = scmp.ne.s32.totalorder %s50, %s51
      %p65 = scmp.eq.s32.totalorder %s22, 1
      %p66 = por %p64, %p65
      %p68 = scmp.ne.s32.totalorder %s51, %s67
      %p69 = scmp.eq.s32.totalorder %s22, 0
      %p70 = por %p68, %p69
      %s71 = ssub.s32 %s25, %s34
      %s72 = ssub.s32 %s24, %s38
      %s73 = sor.u32 %s71, %s72
      %p74 = scmp.eq.s32.totalorder %s73, 0
      %s76 = sadd.s32 %s75, 1
      %s77 = scalar_select %p74, %s75, %s76
      %p80 = pneg %p74
      %p81 = scmp.eq.s32.totalorder %s16, 1
      %p82 = por %p80, %p81
      %p83 = scmp.ne.s32.totalorder %s75, %s78
      %p84 = scmp.eq.s32.totalorder %s16, 0
      %p85 = por %p83, %p84
      %p86 = scmp.ne.s32.totalorder %s75, %s78
      %p87 = scmp.eq.s32.totalorder %s21, 1
      %p88 = por %p86, %p87
      %p89 = scmp.ne.s32.totalorder %s78, %s79
      %p90 = scmp.eq.s32.totalorder %s21, 0
      %p91 = por %p89, %p90
      %p92 = scmp.ne.s32.totalorder %s78, %s79
      %p93 = scmp.eq.s32.totalorder %s22, 1
      %p94 = por %p92, %p93
      %p96 = scmp.ne.s32.totalorder %s79, %s95
      %p97 = scmp.eq.s32.totalorder %s22, 0
      %p98 = por %p96, %p97
      %s99 = ssub.s32 %s24, %s38
      %p100 = scmp.eq.s32.totalorder %s99, 0
      %s102 = sadd.s32 %s101, 1
      %s103 = scalar_select %p100, %s101, %s102
      %p106 = pneg %p100
      %p107 = scmp.eq.s32.totalorder %s16, 1
      %p108 = por %p106, %p107
      %p109 = scmp.ne.s32.totalorder %s101, %s104
      %p110 = scmp.eq.s32.totalorder %s16, 0
      %p111 = por %p109, %p110
      %p112 = scmp.ne.s32.totalorder %s101, %s104
      %p113 = scmp.eq.s32.totalorder %s21, 1
      %p114 = por %p112, %p113
      %p115 = scmp.ne.s32.totalorder %s104, %s105
      %p116 = scmp.eq.s32.totalorder %s21, 0
      %p117 = por %p115, %p116
      %p118 = scmp.ne.s32.totalorder %s104, %s105
      %p119 = scmp.eq.s32.totalorder %s22, 1
      %p120 = por %p118, %p119
      %p122 = scmp.ne.s32.totalorder %s105, %s121
      %p123 = scmp.eq.s32.totalorder %s22, 0
      %p124 = por %p122, %p123
      %s125 = ssub.s32 %s23, %s42
      %s126 = ssub.s32 %s24, %s38
      %s127 = sor.u32 %s125, %s126
      %p128 = scmp.eq.s32.totalorder %s127, 0
      %s130 = sadd.s32 %s129, 1
      %s131 = scalar_select %p128, %s129, %s130
      %p134 = pneg %p128
      %p135 = scmp.eq.s32.totalorder %s16, 1
      %p136 = por %p134, %p135
      %p137 = scmp.ne.s32.totalorder %s129, %s132
      %p138 = scmp.eq.s32.totalorder %s16, 0
      %p139 = por %p137, %p138
      %p140 = scmp.ne.s32.totalorder %s129, %s132
      %p141 = scmp.eq.s32.totalorder %s21, 1
      %p142 = por %p140, %p141
      %p143 = scmp.ne.s32.totalorder %s132, %s133
      %p144 = scmp.eq.s32.totalorder %s21, 0
      %p145 = por %p143, %p144
      %p146 = scmp.ne.s32.totalorder %s132, %s133
      %p147 = scmp.eq.s32.totalorder %s22, 1
      %p148 = por %p146, %p147
      %p150 = scmp.ne.s32.totalorder %s133, %s149
      %p151 = scmp.eq.s32.totalorder %s22, 0
      %p152 = por %p150, %p151
      %p153 = scmp.le.s32.totalorder 1, %s16
      %p154 = scmp.lt.s32.totalorder %s16, 3
      %p155 = pnand %p153, %p154
      %p156 = pneg %p155
      // Predicated region
      $region9: #{tpu_custom_call.1} parent=5 // pred_check
        _
      $region10: #{tpu_custom_call.1} parent=5 // pred_check_branch
        %158 = sbr.rel (%p155) target = $region12
      $region11: #{tpu_custom_call.1} parent=5 // pred_region
        %s159 = ssub.s32 %s16, 1
        // Predicated region
        $region13: #{tpu_custom_call.1} parent=11 // pred_check
          %p160 = pneg %p91
        $region14: #{tpu_custom_call.1} parent=11 // pred_check_branch
          %162 = sbr.rel (%p160) target = $region16
        $region15: #{tpu_custom_call.1} parent=11 // pred_region
          %s163 = smul.u32 32, %s28
          %s165 = ssub.s32 4096, 4096
          %166 = vsyncadd [#allocation7], %s165
          %s167 = sadd.s32 %s27, %s163
          %s168 = smul.addr %s167, 128
          %s169 = scalar_lea.hbm %s1, %s168
          %s170 = sshll.u32 [#allocation6], 4
          %s171 = int_to_ptr.vmem [resolvable:$true] %s170
          %176 = dma.hbm_to_vmem [thread:$0]  %s169, 4096, %s171, [#allocation7], 128, 128, 8
        $region16: #{tpu_custom_call.1} parent=11 // pred_fallthru
          _
        // Predicated region
        $region17: #{tpu_custom_call.1} parent=11 // pred_check
          %p177 = pneg %p117
        $region18: #{tpu_custom_call.1} parent=11 // pred_check_branch
          %179 = sbr.rel (%p177) target = $region20
        $region19: #{tpu_custom_call.1} parent=11 // pred_region
          %p180 = scmp.lt.s32.totalorder %s27, 0
          %s181 = scalar_select %p180, %s27, 0
          %s182 = scalar_lea.vmem %s2, %s181
        $region20: #{tpu_custom_call.1} parent=11 // pred_fallthru
          _
      $region12: #{tpu_custom_call.1} parent=5 // pred_fallthru
        _
      %p183 = scmp.lt.s32.totalorder %s16, 2
      // Predicated region
      $region21: #{tpu_custom_call.1} parent=5 // pred_check
        %p184 = pneg %p183
      $region22: #{tpu_custom_call.1} parent=5 // pred_check_branch
        %186 = sbr.rel (%p184) target = $region24
      $region23: #{tpu_custom_call.1} parent=5 // pred_region
        // Predicated region
        $region25: #{tpu_custom_call.1} parent=23 // pred_check
          %p187 = pneg %p57
        $region26: #{tpu_custom_call.1} parent=23 // pred_check_branch
          %189 = sbr.rel (%p187) target = $region28
        $region27: #{tpu_custom_call.1} parent=23 // pred_region
          %s190 = sand.u32 %s47, 1
          %s191 = scalar_lea.sflag [#allocation4], %s190
          %s192 = sand.u32 %s47, 1
          %s193 = smul.addr %s192, 128
          %s194 = scalar_lea.vmem [#allocation3], %s193
          %s195 = smul.u32 8, %s23
          %s196 = smul.u32 2, %s25
          %s198 = ssub.s32 2048, 2048
          %199 = vsyncadd %s191, %s198
          %s200 = smul.addr %s195, 2
          %s201 = sadd.s32 %s196, %s200
          %s202 = smul.addr %s201, 128
          %s203 = scalar_lea.hbm %s0, %s202
          %s204 = sshll.u32 %s194, 4
          %s205 = int_to_ptr.vmem [resolvable:$true] %s204
          %210 = dma.hbm_to_vmem [thread:$0]  %s203, 2048, %s205, %s191, 256, 256, 16
        $region28: #{tpu_custom_call.1} parent=23 // pred_fallthru
          _
      $region24: #{tpu_custom_call.1} parent=5 // pred_fallthru
        _
      %p211 = scmp.le.s32.totalorder 1, %s16
      %p212 = scmp.lt.s32.totalorder %s16, 3
      %p213 = pnand %p211, %p212
      %p214 = pneg %p213
      // Predicated region
      $region29: #{tpu_custom_call.1} parent=5 // pred_check
        _
      $region30: #{tpu_custom_call.1} parent=5 // pred_check_branch
        %216 = sbr.rel (%p213) target = $region32
      $region31: #{tpu_custom_call.1} parent=5 // pred_region
        %s217 = ssub.s32 %s16, 1
        %s218 = sand.u32 %s50, 1
        %s219 = scalar_lea.sflag [#allocation4], %s218
        %s220 = sand.u32 %s50, 1
        %s221 = smul.addr %s220, 128
        %s222 = scalar_lea.vmem [#allocation3], %s221
        // Predicated region
        $region33: #{tpu_custom_call.1} parent=31 // pred_check
          %p223 = pneg %p63
        $region34: #{tpu_custom_call.1} parent=31 // pred_check_branch
          %225 = sbr.rel (%p223) target = $region36
        $region35: #{tpu_custom_call.1} parent=31 // pred_region
          %226 = dma.done %s219, 2048
        $region36: #{tpu_custom_call.1} parent=31 // pred_fallthru
          _
        // Predicated region
        $region37: #{tpu_custom_call.1} parent=31 // pred_check
          %p227 = pneg %p91
        $region38: #{tpu_custom_call.1} parent=31 // pred_check_branch
          %229 = sbr.rel (%p227) target = $region40
        $region39: #{tpu_custom_call.1} parent=31 // pred_region
          %230 = dma.done [#allocation7], 4096
        $region40: #{tpu_custom_call.1} parent=31 // pred_fallthru
          _
        %s231 = sand.u32 %s50, 1
        %s232 = scalar_lea.sflag [#allocation4], %s231
        %s233 = sand.u32 %s50, 1
        %s234 = smul.addr %s233, 128
        %s235 = scalar_lea.vmem [#allocation3], %s234
        %p236 = pneg %p63
        %p237 = pneg %p60
        %p238 = pneg %p91
        %p239 = pneg %p88
        %p240 = scmp.lt.s32.totalorder %s27, 0
        %s241 = scalar_select %p240, %s27, 0
        %s242 = scalar_lea.vmem %s2, %s241
        %p243 = pneg %p117
        %p244 = pneg %p114
        %p245 = pneg %p145
        %p246 = pneg %p142
        %s247 = sand.u32 %s132, 1
        %s248 = scalar_lea.sflag [#allocation5], %s247
        %s249 = sand.u32 %s132, 1
        %s250 = smul.addr %s249, 64
        %s251 = scalar_lea.vmem [#allocation8], %s250
        %s252 = smul.u32 8, %s26
        %s253 = smul.u32 2, %s28
        %s254 = smul.u32 32, %s28
        %p255 = scmp.lt.s32.totalorder %s27, 0
        %s256 = scalar_select %p255, %s27, 0
        %s257 = scalar_lea.vmem %s2, %s256
        %s258 = smul.u32 8, %s26
        %p259 = scmp.eq.s32.totalorder %s28, 0
        // Predicated region
        $region41: #{tpu_custom_call.1} parent=31 // pred_check
          %p260 = pneg %p259
        $region42: #{tpu_custom_call.1} parent=31 // pred_check_branch
          %262 = sbr.rel (%p260) target = $region44
        $region43: #{tpu_custom_call.1} parent=31 // pred_region
          %263 = vst [vmem:[#allocation2] sm:$0xff] 0.0
          %264 = vst [vmem:[#allocation2 + $0x8] sm:$0xff] 0.0
          %265 = vst [vmem:[#allocation2 + $0x10] sm:$0xff] 0.0
          %266 = vst [vmem:[#allocation2 + $0x18] sm:$0xff] 0.0
          %267 = vst [vmem:[#allocation2 + $0x20] sm:$0xff] 0.0
          %268 = vst [vmem:[#allocation2 + $0x28] sm:$0xff] 0.0
          %269 = vst [vmem:[#allocation2 + $0x30] sm:$0xff] 0.0
          %270 = vst [vmem:[#allocation2 + $0x38] sm:$0xff] 0.0
        $region44: #{tpu_custom_call.1} parent=31 // pred_fallthru
          _
        %v271 = vld [vmem:[%s222] sm:$0xff]
        %v272 = vld [vmem:[%s222 + $0x8] sm:$0xff]
        %v273 = vld [vmem:[%s222 + $0x10] sm:$0xff]
        %v274 = vld [vmem:[%s222 + $0x18] sm:$0xff]
        %v275 = vld [vmem:[%s222 + $0x20] sm:$0xff]
        %v276 = vld [vmem:[%s222 + $0x28] sm:$0xff]
        %v277 = vld [vmem:[%s222 + $0x30] sm:$0xff]
        %v278 = vld [vmem:[%s222 + $0x38] sm:$0xff]
        %v279 = vld [vmem:[%s222 + $0x40] sm:$0xff]
        %v280 = vld [vmem:[%s222 + $0x48] sm:$0xff]
        %v281 = vld [vmem:[%s222 + $0x50] sm:$0xff]
        %v282 = vld [vmem:[%s222 + $0x58] sm:$0xff]
        %v283 = vld [vmem:[%s222 + $0x60] sm:$0xff]
        %v284 = vld [vmem:[%s222 + $0x68] sm:$0xff]
        %v285 = vld [vmem:[%s222 + $0x70] sm:$0xff]
        %v286 = vld [vmem:[%s222 + $0x78] sm:$0xff]
        %v287 = vld [vmem:[#allocation6] sm:$0xff]
        %v288 = vld [vmem:[#allocation6 + $0x8] sm:$0xff]
        %v289 = vld [vmem:[#allocation6 + $0x10] sm:$0xff]
        %v290 = vld [vmem:[#allocation6 + $0x18] sm:$0xff]
        %v291 = vld [vmem:[#allocation6 + $0x20] sm:$0xff]
        %v292 = vld [vmem:[#allocation6 + $0x28] sm:$0xff]
        %v293 = vld [vmem:[#allocation6 + $0x30] sm:$0xff]
        %v294 = vld [vmem:[#allocation6 + $0x38] sm:$0xff]
        %v295 = vld [vmem:[#allocation6 + $0x40] sm:$0xff]
        %v296 = vld [vmem:[#allocation6 + $0x48] sm:$0xff]
        %v297 = vld [vmem:[#allocation6 + $0x50] sm:$0xff]
        %v298 = vld [vmem:[#allocation6 + $0x58] sm:$0xff]
        %v299 = vld [vmem:[#allocation6 + $0x60] sm:$0xff]
        %v300 = vld [vmem:[#allocation6 + $0x68] sm:$0xff]
        %v301 = vld [vmem:[#allocation6 + $0x70] sm:$0xff]
        %v302 = vld [vmem:[#allocation6 + $0x78] sm:$0xff]
        %v303 = vld [vmem:[#allocation6 + $0x80] sm:$0xff]
        %v304 = vld [vmem:[#allocation6 + $0x88] sm:$0xff]
        %v305 = vld [vmem:[#allocation6 + $0x90] sm:$0xff]
        %v306 = vld [vmem:[#allocation6 + $0x98] sm:$0xff]
        %v307 = vld [vmem:[#allocation6 + $0xa0] sm:$0xff]
        %v308 = vld [vmem:[#allocation6 + $0xa8] sm:$0xff]
        %v309 = vld [vmem:[#allocation6 + $0xb0] sm:$0xff]
        %v310 = vld [vmem:[#allocation6 + $0xb8] sm:$0xff]
        %v311 = vld [vmem:[#allocation6 + $0xc0] sm:$0xff]
        %v312 = vld [vmem:[#allocation6 + $0xc8] sm:$0xff]
        %v313 = vld [vmem:[#allocation6 + $0xd0] sm:$0xff]
        %v314 = vld [vmem:[#allocation6 + $0xd8] sm:$0xff]
        %v315 = vld [vmem:[#allocation6 + $0xe0] sm:$0xff]
        %v316 = vld [vmem:[#allocation6 + $0xe8] sm:$0xff]
        %v317 = vld [vmem:[#allocation6 + $0xf0] sm:$0xff]
        %v318 = vld [vmem:[#allocation6 + $0xf8] sm:$0xff]
        %v319 = vld [vmem:[#allocation2] sm:$0xff]
        %v320 = vld [vmem:[#allocation2 + $0x8] sm:$0xff]
        %v321 = vld [vmem:[#allocation2 + $0x10] sm:$0xff]
        %v322 = vld [vmem:[#allocation2 + $0x18] sm:$0xff]
        %v323 = vld [vmem:[#allocation2 + $0x20] sm:$0xff]
        %v324 = vld [vmem:[#allocation2 + $0x28] sm:$0xff]
        %v325 = vld [vmem:[#allocation2 + $0x30] sm:$0xff]
        %v326 = vld [vmem:[#allocation2 + $0x38] sm:$0xff]
        %327 = vmatprep.subr.mxu0 0.0
        %328 = vmatpush1.msra.mxu0 %v287
        %329 = vmatprep.subr.mxu0 0.0
        %330 = vmatpush1.msra.mxu0 %v288
        %331 = vmatprep.subr.mxu0 0.0
        %332 = vmatpush1.msra.mxu0 %v289
        %333 = vmatprep.subr.mxu0 0.0
        %334 = vmatpush1.msra.mxu0 %v290
        %335 = vmatprep.subr.mxu0 0.0
        %336 = vmatpush1.msra.mxu0 %v291
        %337 = vmatprep.subr.mxu0 0.0
        %338 = vmatpush1.msra.mxu0 %v292
        %339 = vmatprep.subr.mxu0 0.0
        %340 = vmatpush1.msra.mxu0 %v293
        %341 = vmatprep.subr.mxu0 0.0
        %342 = vmatpush1.msra.mxu0 %v294
        %343 = vmatprep.subr.mxu0 0.0
        %344 = vmatpush1.msra.mxu0 %v295
        %345 = vmatprep.subr.mxu0 0.0
        %346 = vmatpush1.msra.mxu0 %v296
        %347 = vmatprep.subr.mxu0 0.0
        %348 = vmatpush1.msra.mxu0 %v297
        %349 = vmatprep.subr.mxu0 0.0
        %350 = vmatpush1.msra.mxu0 %v298
        %351 = vmatprep.subr.mxu0 0.0
        %352 = vmatpush1.msra.mxu0 %v299
        %353 = vmatprep.subr.mxu0 0.0
        %354 = vmatpush1.msra.mxu0 %v300
        %355 = vmatprep.subr.mxu0 0.0
        %356 = vmatpush1.msra.mxu0 %v301
        %357 = vmatprep.subr.mxu0 0.0
        %358 = vmatpush1.msra.mxu0 %v302
        %359 = vmatprep.subr.mxu0 0.0
        %360 = vmatpush1.msra.mxu0 %v303
        %361 = vmatprep.subr.mxu0 0.0
        %362 = vmatpush1.msra.mxu0 %v304
        %363 = vmatprep.subr.mxu0 0.0
        %364 = vmatpush1.msra.mxu0 %v305
        %365 = vmatprep.subr.mxu0 0.0
        %366 = vmatpush1.msra.mxu0 %v306
        %367 = vmatprep.subr.mxu0 0.0
        %368 = vmatpush1.msra.mxu0 %v307
        %369 = vmatprep.subr.mxu0 0.0
        %370 = vmatpush1.msra.mxu0 %v308
        %371 = vmatprep.subr.mxu0 0.0
        %372 = vmatpush1.msra.mxu0 %v309
        %373 = vmatprep.subr.mxu0 0.0
        %374 = vmatpush1.msra.mxu0 %v310
        %375 = vmatprep.subr.mxu0 0.0
        %376 = vmatpush1.msra.mxu0 %v311
        %377 = vmatprep.subr.mxu0 0.0
        %378 = vmatpush1.msra.mxu0 %v312
        %379 = vmatprep.subr.mxu0 0.0
        %380 = vmatpush1.msra.mxu0 %v313
        %381 = vmatprep.subr.mxu0 0.0
        %382 = vmatpush1.msra.mxu0 %v314
        %383 = vmatprep.subr.mxu0 0.0
        %384 = vmatpush1.msra.mxu0 %v315
        %385 = vmatprep.subr.mxu0 0.0
        %386 = vmatpush1.msra.mxu0 %v316
        %387 = vmatprep.subr.mxu0 0.0
        %388 = vmatpush1.msra.mxu0 %v317
        %389 = vmatprep.subr.mxu0 0.0
        %390 = vmatpush1.msra.mxu0 %v318
        %391 = vmatprep.mubr.f32.mxu0 %v272
        %392 = vmatmul.mubr.f32.gmra.mrb[0].mxu0 %v271
        %v393 = vpop.f32.mrb[0].mxu0
        %v394 = vadd.f32 0.0, %v393
        %v395 = vpop.f32.mrb[0].mxu0
        %396 = vmatprep.mubr.f32.mxu0 %v274
        %397 = vmatmul.mubr.f32.gmra.mrb[0].mxu0 %v273
        %v398 = vpop.f32.mrb[0].mxu0
        %v399 = vadd.f32 0.0, %v398
        %v400 = vpop.f32.mrb[0].mxu0
        %401 = vmatprep.mubr.f32.mxu0 %v276
        %402 = vmatmul.mubr.f32.gmra.mrb[0].mxu0 %v275
        %v403 = vpop.f32.mrb[0].mxu0
        %v404 = vadd.f32 0.0, %v403
        %v405 = vpop.f32.mrb[0].mxu0
        %406 = vmatprep.mubr.f32.mxu0 %v278
        %407 = vmatmul.mubr.f32.gmra.mrb[0].mxu0 %v277
        %v408 = vpop.f32.mrb[0].mxu0
        %v409 = vadd.f32 0.0, %v408
        %v410 = vpop.f32.mrb[0].mxu0
        %411 = vmatprep.mubr.f32.mxu0 %v280
        %412 = vmatmul.mubr.f32.gmra.mrb[0].mxu0 %v279
        %v413 = vpop.f32.mrb[0].mxu0
        %v414 = vadd.f32 0.0, %v413
        %v415 = vpop.f32.mrb[0].mxu0
        %416 = vmatprep.mubr.f32.mxu0 %v282
        %417 = vmatmul.mubr.f32.gmra.mrb[0].mxu0 %v281
        %v418 = vpop.f32.mrb[0].mxu0
        %v419 = vadd.f32 0.0, %v418
        %v420 = vpop.f32.mrb[0].mxu0
        %421 = vmatprep.mubr.f32.mxu0 %v284
        %422 = vmatmul.mubr.f32.gmra.mrb[0].mxu0 %v283
        %v423 = vpop.f32.mrb[0].mxu0
        %v424 = vadd.f32 0.0, %v423
        %v425 = vpop.f32.mrb[0].mxu0
        %426 = vmatprep.mubr.f32.mxu0 %v286
        %427 = vmatmul.mubr.f32.gmra.mrb[0].mxu0 %v285
        %v428 = vpop.f32.mrb[0].mxu0
        %v429 = vadd.f32 0.0, %v428
        %v430 = vpop.f32.mrb[0].mxu0
        %431 = vdwg.mxu0
        %v432 = vadd.f32 %v319, %v394
        %v433 = vadd.f32 %v320, %v399
        %v434 = vadd.f32 %v321, %v404
        %v435 = vadd.f32 %v322, %v409
        %v436 = vadd.f32 %v323, %v414
        %v437 = vadd.f32 %v324, %v419
        %v438 = vadd.f32 %v325, %v424
        %v439 = vadd.f32 %v326, %v429
        %440 = vst [vmem:[#allocation2] sm:$0xff] %v432
        %441 = vst [vmem:[#allocation2 + $0x8] sm:$0xff] %v433
        %442 = vst [vmem:[#allocation2 + $0x10] sm:$0xff] %v434
        %443 = vst [vmem:[#allocation2 + $0x18] sm:$0xff] %v435
        %444 = vst [vmem:[#allocation2 + $0x20] sm:$0xff] %v436
        %445 = vst [vmem:[#allocation2 + $0x28] sm:$0xff] %v437
        %446 = vst [vmem:[#allocation2 + $0x30] sm:$0xff] %v438
        %447 = vst [vmem:[#allocation2 + $0x38] sm:$0xff] %v439
        // Predicated region
        $region45: #{tpu_custom_call.1} parent=31 // pred_check
          %p448 = pneg %p259
        $region46: #{tpu_custom_call.1} parent=31 // pred_check_branch
          %450 = sbr.rel (%p448) target = $region48
        $region47: #{tpu_custom_call.1} parent=31 // pred_region
          %v451 = vld [vmem:[#allocation2] sm:$0xff]
          %v452 = vld [vmem:[#allocation2 + $0x8] sm:$0xff]
          %v453 = vld [vmem:[#allocation2 + $0x10] sm:$0xff]
          %v454 = vld [vmem:[#allocation2 + $0x18] sm:$0xff]
          %v455 = vld [vmem:[#allocation2 + $0x20] sm:$0xff]
          %v456 = vld [vmem:[#allocation2 + $0x28] sm:$0xff]
          %v457 = vld [vmem:[#allocation2 + $0x30] sm:$0xff]
          %v458 = vld [vmem:[#allocation2 + $0x38] sm:$0xff]
          %v459 = vld [vmem:[%s257] sm:$0x1]
          %v461 = vlaneseq
          %v462 = vshrl.u32 %v461, 7
          %v463 = vsub.s32 0, %v462
          %v464 = vrot.slane %v459, %v463
          %v466 = vadd.f32 %v451, %v464
          %v467 = vadd.f32 %v452, %v464
          %v468 = vadd.f32 %v453, %v464
          %v469 = vadd.f32 %v454, %v464
          %v470 = vadd.f32 %v455, %v464
          %v471 = vadd.f32 %v456, %v464
          %v472 = vadd.f32 %v457, %v464
          %v473 = vadd.f32 %v458, %v464
          %474 = vst [vmem:[%s251] sm:$0xff] %v466
          %475 = vst [vmem:[%s251 + $0x8] sm:$0xff] %v467
          %476 = vst [vmem:[%s251 + $0x10] sm:$0xff] %v468
          %477 = vst [vmem:[%s251 + $0x18] sm:$0xff] %v469
          %478 = vst [vmem:[%s251 + $0x20] sm:$0xff] %v470
          %479 = vst [vmem:[%s251 + $0x28] sm:$0xff] %v471
          %480 = vst [vmem:[%s251 + $0x30] sm:$0xff] %v472
          %481 = vst [vmem:[%s251 + $0x38] sm:$0xff] %v473
        $region48: #{tpu_custom_call.1} parent=31 // pred_fallthru
          _
        %s482 = sand.u32 %s132, 1
        %s483 = scalar_lea.sflag [#allocation5], %s482
        %s484 = sand.u32 %s132, 1
        %s485 = smul.addr %s484, 64
        %s486 = scalar_lea.vmem [#allocation8], %s485
        // Predicated region
        $region49: #{tpu_custom_call.1} parent=31 // pred_check
          %p487 = pneg %p142
        $region50: #{tpu_custom_call.1} parent=31 // pred_check_branch
          %489 = sbr.rel (%p487) target = $region52
        $region51: #{tpu_custom_call.1} parent=31 // pred_region
          %s490 = smul.u32 8, %s26
          %s492 = ssub.s32 1024, 1024
          %493 = vsyncadd %s483, %s492
          %s494 = sadd.s32 %s27, %s490
          %s495 = smul.addr %s494, 128
          %s496 = scalar_lea.hbm %s3, %s495
          %s497 = sshll.u32 %s486, 4
          %s498 = int_to_ptr.vmem [resolvable:$true] %s497
          %503 = dma.vmem_to_hbm [thread:$0]  %s498, 1024, %s496, %s483, 128, 128, 8
        $region52: #{tpu_custom_call.1} parent=31 // pred_fallthru
          _
      $region32: #{tpu_custom_call.1} parent=5 // pred_fallthru
        _
      %p504 = scmp.le.s32.totalorder 2, %s16
      // Predicated region
      $region53: #{tpu_custom_call.1} parent=5 // pred_check
        %p505 = pneg %p504
      $region54: #{tpu_custom_call.1} parent=5 // pred_check_branch
        %507 = sbr.rel (%p505) target = $region56
      $region55: #{tpu_custom_call.1} parent=5 // pred_region
        %s508 = ssub.s32 %s16, 2
        // Predicated region
        $region57: #{tpu_custom_call.1} parent=55 // pred_check
          %p509 = pneg %p148
        $region58: #{tpu_custom_call.1} parent=55 // pred_check_branch
          %511 = sbr.rel (%p509) target = $region60
        $region59: #{tpu_custom_call.1} parent=55 // pred_region
          %s512 = sand.u32 %s133, 1
          %s513 = scalar_lea.sflag [#allocation5], %s512
          %s514 = sand.u32 %s133, 1
          %s515 = smul.addr %s514, 64
          %s516 = scalar_lea.vmem [#allocation8], %s515
          %517 = dma.done %s513, 1024
        $region60: #{tpu_custom_call.1} parent=55 // pred_fallthru
          _
      $region56: #{tpu_custom_call.1} parent=5 // pred_fallthru
        _
    $region6: #{tpu_custom_call.1} parent=1 // loop_footer
      %s20 = sadd.s32 1, %s16
    $region7: #{tpu_custom_call.1} parent=1 // loop_footer_branch
      %15 = sbr.rel target = $region3
    $region8: #{tpu_custom_call.1} parent=1 // loop_exit
      _
    %518 = vsyncpa [#allocation4], 1
    %s519 = scalar_lea.sflag [#allocation4], 1
    %520 = vsyncpa %s519, 1
    %521 = vsyncpa [#allocation7], 1
    %522 = vsyncpa [#allocation5], 1
    %s523 = scalar_lea.sflag [#allocation5], 1
    %524 = vsyncpa %s523, 1

</llo_original>
